<compile_context>
chip_gen: v5e
topology: v5e:2x2
jax: 0.10.0
libtpu: 0.0.40
codegen_flags: <defaults>
</compile_context>

<pallas_src>
import jax
import jax.numpy as jnp
from jax.experimental import pallas as pl
from jax.experimental.pallas import tpu as pltpu


def deconv_stats_kernel(xT_ref, wT_ref, ssum_ref, ssq_ref):
    """Pass 1: y-tile = Wt @ Xt (kept in VMEM only); accumulate per-row sum / sumsq."""
    @pl.when(pl.program_id(1) == 0)
    def _():
        ssum_ref[...] = jnp.zeros_like(ssum_ref)
        ssq_ref[...] = jnp.zeros_like(ssq_ref)

    y = jnp.dot(wT_ref[...], xT_ref[...], preferred_element_type=jnp.float32)  # (C4, tm)
    ssum_ref[...] += jnp.sum(y, axis=1, keepdims=True)
    ssq_ref[...] += jnp.sum(y * y, axis=1, keepdims=True)


def deconv_bn_relu_kernel(xT_ref, wT_ref, scale_ref, shift_ref, out_ref):
    """Pass 2: recompute y-tile (K=Cin, cheap) and fuse precomputed BN affine + ReLU."""
    y = jnp.dot(wT_ref[...], xT_ref[...], preferred_element_type=jnp.float32)  # (C4, tm)
    out_ref[...] = jnp.maximum(y * scale_ref[...] + shift_ref[...], 0.0)


def _pick_tiling(M, tm_max=512, n_par=2):
    """Largest lane tile <= tm_max that evenly divides the per-core work."""
    if M % 128 != 0:
        return 1, M                      # fallback: single full-extent block
    if M % (n_par * 128) != 0:
        n_par = 1
    per_core = M // n_par
    tm = min(tm_max, per_core)
    while per_core % tm != 0 or tm % 128 != 0:
        tm -= 128
    return n_par, tm


def deconv_block_forward(x, w, gamma, beta, eps=1e-5, tm_max=512, n_par=2):
    # x: (N, Cin, H, W)   w: (Cin, Cout, 2, 2)   gamma/beta: (Cout,)
    N, Cin, H, W = x.shape
    Cout = w.shape[1]
    C4 = 4 * Cout
    M = N * H * W

    n_par, tm = _pick_tiling(M, tm_max, n_par)
    tiles = M // tm
    tiles_per_core = tiles // n_par

    # Layout glue on the SMALL tensors only (X is 4*Cout/Cin times smaller than the output).
    x_t = jnp.transpose(x, (1, 0, 2, 3)).reshape(Cin, M).astype(jnp.float32)   # (Cin, M)
    w_t = jnp.transpose(w, (2, 3, 1, 0)).reshape(C4, Cin).astype(jnp.float32)  # (C4, Cin)

    # ---------------- Pass 1: BatchNorm statistics (no Y written to HBM) ----------------
    ssum_p, ssq_p = pl.pallas_call(
        deconv_stats_kernel,
        out_shape=(
            jax.ShapeDtypeStruct((n_par, C4, 1), jnp.float32),
            jax.ShapeDtypeStruct((n_par, C4, 1), jnp.float32),
        ),
        grid_spec=pltpu.PrefetchScalarGridSpec(
            num_scalar_prefetch=0,
            grid=(n_par, tiles_per_core),
            in_specs=[
                pl.BlockSpec((Cin, tm), lambda p, i: (0, p * tiles_per_core + i)),
                pl.BlockSpec((C4, Cin), lambda p, i: (0, 0)),
            ],
            out_specs=[
                pl.BlockSpec((None, C4, 1), lambda p, i: (p, 0, 0)),  # per-core partial acc
                pl.BlockSpec((None, C4, 1), lambda p, i: (p, 0, 0)),  # per-core partial acc
            ],
        ),
        compiler_params=pltpu.CompilerParams(
            dimension_semantics=("parallel", "arbitrary")),
        cost_estimate=pl.CostEstimate(
            flops=2 * M * Cin * C4 + 3 * M * C4,
            transcendentals=0,
            bytes_accessed=4 * (M * Cin + Cin * C4 + 2 * n_par * C4)),
    )(x_t, w_t)

    # Finalize training-mode BatchNorm2d stats (biased variance over N, 2H, 2W).
    # Each channel co has N*2H*2W = 4*M elements spread over the 4 (kh,kw) row groups.
    count = jnp.float32(4 * M)
    ch_sum = ssum_p.sum(axis=0).reshape(4, Cout).sum(axis=0)
    ch_sq = ssq_p.sum(axis=0).reshape(4, Cout).sum(axis=0)
    mean = ch_sum / count
    # TODO(synk): E[y^2]-mean^2 can lose precision for large-mean channels; clamp >= 0.
    var = jnp.maximum(ch_sq / count - mean * mean, 0.0)
    inv_std = gamma.astype(jnp.float32) / jnp.sqrt(var + eps)
    scale = jnp.tile(inv_std, 4).reshape(C4, 1)
    shift = jnp.tile(beta.astype(jnp.float32) - mean * inv_std, 4).reshape(C4, 1)

    # ---------------- Pass 2: recompute matmul + fused BN affine + ReLU ----------------
    out_t = pl.pallas_call(
        deconv_bn_relu_kernel,
        out_shape=jax.ShapeDtypeStruct((C4, M), jnp.float32),
        grid_spec=pltpu.PrefetchScalarGridSpec(
            num_scalar_prefetch=0,
            grid=(tiles,),
            in_specs=[
                pl.BlockSpec((Cin, tm), lambda i: (0, i)),
                pl.BlockSpec((C4, Cin), lambda i: (0, 0)),
                pl.BlockSpec((C4, 1), lambda i: (0, 0)),
                pl.BlockSpec((C4, 1), lambda i: (0, 0)),
            ],
            out_specs=pl.BlockSpec((C4, tm), lambda i: (0, i)),
        ),
        compiler_params=pltpu.CompilerParams(
            dimension_semantics=("parallel",)),
        cost_estimate=pl.CostEstimate(
            flops=2 * M * Cin * C4 + 2 * M * C4,
            transcendentals=0,
            bytes_accessed=4 * (M * Cin + Cin * C4 + M * C4)),
    )(x_t, w_t, scale, shift)

    # TODO(synk): the stride-2 NCHW interleave stays as XLA layout glue; a strided HBM
    # output BlockSpec (out[:, :, kh::2, kw::2]) is not expressible in Pallas.
    # out_t[(kh*2+kw)*Cout+co, (n*H+h)*W+w] -> out[n, co, 2h+kh, 2w+kw]
    out = out_t.reshape(2, 2, Cout, N, H, W)
    out = jnp.transpose(out, (3, 2, 4, 0, 5, 1)).reshape(N, Cout, 2 * H, 2 * W)
    return out


def ref_forward(x, w, gamma, beta, eps=1e-5):
    """Pure-JAX reference mirroring PyTorch semantics (training-mode BatchNorm)."""
    N, Cin, H, W = x.shape
    Cout = w.shape[1]
    y = jnp.zeros((N, Cout, 2 * H, 2 * W), jnp.float32)
    for kh in range(2):
        for kw in range(2):
            contrib = jnp.einsum('nchw,cd->ndhw', x, w[:, :, kh, kw])
            y = y.at[:, :, kh::2, kw::2].set(contrib)
    mean = y.mean(axis=(0, 2, 3), keepdims=True)
    var = y.var(axis=(0, 2, 3), keepdims=True)   # biased, as PyTorch uses for normalization
    yn = (y - mean) / jnp.sqrt(var + eps)
    yn = yn * gamma.reshape(1, Cout, 1, 1) + beta.reshape(1, Cout, 1, 1)
    return jnp.maximum(yn, 0.0)


if __name__ == "__main__":
    key = jax.random.PRNGKey(0)
    k1, k2 = jax.random.split(key)

    N, Cin, Cout, H, W = 2, 4, 8, 16, 16
    x = jax.random.normal(k1, (N, Cin, H, W), dtype=jnp.float32)
    # nn.ConvTranspose2d weight shape: (in_channels, out_channels, kH, kW), bias=False
    w = jax.random.normal(k2, (Cin, Cout, 2, 2), dtype=jnp.float32) * 0.1
    # nn.BatchNorm2d default init: gamma=1, beta=0
    gamma = jnp.ones((Cout,), jnp.float32)
    beta = jnp.zeros((Cout,), jnp.float32)

    fwd = jax.jit(deconv_block_forward)
    out = jax.block_until_ready(fwd(x, w, gamma, beta))

    ref = ref_forward(x, w, gamma, beta)
    assert out.shape == (N, Cout, 2 * H, 2 * W), out.shape
    assert jnp.allclose(out, ref, atol=1e-4, rtol=1e-4), float(jnp.max(jnp.abs(out - ref)))

    print("KERNEL_OK")
</pallas_src>

<mosaic_0001>
module attributes {stable_mosaic.version = 11 : i64} {
  func.func @deconv_stats_kernel(%arg0: i32, %arg1: i32, %arg2: memref<4x256xf32, #tpu.memory_space<vmem>>, %arg3: memref<32x4xf32, #tpu.memory_space<vmem>>, %arg4: memref<1x32x1xf32, #tpu.memory_space<vmem>>, %arg5: memref<1x32x1xf32, #tpu.memory_space<vmem>>) attributes {dimension_semantics = [#tpu.dimension_semantics<parallel>, #tpu.dimension_semantics<arbitrary>], iteration_bounds = array<i64: 2, 1>, scalar_prefetch = 0 : i64, scratch_operands = 0 : i64, tpu.core_type = #tpu.core_type<tc>, window_params = [{transform_indices = @transform_0, window_bounds = array<i64: 4, 256>}, {pipeline_mode = #tpu.pipeline_mode<synchronous>, transform_indices = @transform_1, window_bounds = array<i64: 32, 4>}, {transform_indices = @transform_2, window_bounds = array<i64: 1, 32, 1>}, {transform_indices = @transform_3, window_bounds = array<i64: 1, 32, 1>}]} {
    %c0_i32 = arith.constant 0 : i32
    %0 = arith.cmpi eq, %arg1, %c0_i32 : i32
    %1 = arith.extui %0 : i1 to i32
    %c0_i32_0 = arith.constant 0 : i32
    %2 = arith.cmpi ne, %1, %c0_i32_0 : i32
    scf.if %2 {
      %cst_18 = arith.constant 0.000000e+00 : f32
      %23 = vector.broadcast %cst_18 : f32 to vector<32x1xf32>
      %c0_19 = arith.constant 0 : index
      %c0_20 = arith.constant 0 : index
      %c0_21 = arith.constant 0 : index
      %24 = vector.load %arg4[%c0_19, %c0_20, %c0_21] : memref<1x32x1xf32, #tpu.memory_space<vmem>>, vector<1x32x1xf32>
      %25 = vector.shape_cast %24 : vector<1x32x1xf32> to vector<32x1xf32>
      %26 = vector.shape_cast %23 : vector<32x1xf32> to vector<1x32x1xf32>
      tpu.vector_store %arg4[%c0_19, %c0_20, %c0_21], %26 {strides = array<i32>} : memref<1x32x1xf32, #tpu.memory_space<vmem>>, vector<1x32x1xf32>,
      %cst_22 = arith.constant 0.000000e+00 : f32
      %27 = vector.broadcast %cst_22 : f32 to vector<32x1xf32>
      %c0_23 = arith.constant 0 : index
      %c0_24 = arith.constant 0 : index
      %c0_25 = arith.constant 0 : index
      %28 = vector.load %arg5[%c0_23, %c0_24, %c0_25] : memref<1x32x1xf32, #tpu.memory_space<vmem>>, vector<1x32x1xf32>
      %29 = vector.shape_cast %28 : vector<1x32x1xf32> to vector<32x1xf32>
      %30 = vector.shape_cast %27 : vector<32x1xf32> to vector<1x32x1xf32>
      tpu.vector_store %arg5[%c0_23, %c0_24, %c0_25], %30 {strides = array<i32>} : memref<1x32x1xf32, #tpu.memory_space<vmem>>, vector<1x32x1xf32>,
    } else {
    }
    %c0 = arith.constant 0 : index
    %c0_1 = arith.constant 0 : index
    %3 = vector.load %arg3[%c0, %c0_1] : memref<32x4xf32, #tpu.memory_space<vmem>>, vector<32x4xf32>
    %c0_2 = arith.constant 0 : index
    %c0_3 = arith.constant 0 : index
    %4 = vector.load %arg2[%c0_2, %c0_3] : memref<4x256xf32, #tpu.memory_space<vmem>>, vector<4x256xf32>
    %cst = arith.constant dense<0.000000e+00> : vector<32x256xf32>
    %5 = tpu.matmul %3, %4, %cst {dimension_numbers = #tpu.dot_dimension_numbers<[1], [0], [0], [1], [0, 0, 1, 1], [], []>} : vector<32x4xf32>, vector<4x256xf32>, vector<32x256xf32> -> vector<32x256xf32>
    %c0_4 = arith.constant 0 : index
    %c0_5 = arith.constant 0 : index
    %c0_6 = arith.constant 0 : index
    %6 = vector.load %arg4[%c0_4, %c0_5, %c0_6] : memref<1x32x1xf32, #tpu.memory_space<vmem>>, vector<1x32x1xf32>
    %7 = vector.shape_cast %6 : vector<1x32x1xf32> to vector<32x1xf32>
    %cst_7 = arith.constant dense<0.000000e+00> : vector<32xf32>
    %8 = vector.multi_reduction <add>, %5, %cst_7 [1] : vector<32x256xf32> to vector<32xf32>
    %9 = vector.shape_cast %8 : vector<32xf32> to vector<32x1xf32>
    %10 = arith.addf %7, %9 : vector<32x1xf32>
    %c0_8 = arith.constant 0 : index
    %c0_9 = arith.constant 0 : index
    %c0_10 = arith.constant 0 : index
    %11 = vector.load %arg4[%c0_8, %c0_9, %c0_10] : memref<1x32x1xf32, #tpu.memory_space<vmem>>, vector<1x32x1xf32>
    %12 = vector.shape_cast %11 : vector<1x32x1xf32> to vector<32x1xf32>
    %13 = vector.shape_cast %10 : vector<32x1xf32> to vector<1x32x1xf32>
    tpu.vector_store %arg4[%c0_8, %c0_9, %c0_10], %13 {strides = array<i32>} : memref<1x32x1xf32, #tpu.memory_space<vmem>>, vector<1x32x1xf32>,
    %c0_11 = arith.constant 0 : index
    %c0_12 = arith.constant 0 : index
    %c0_13 = arith.constant 0 : index
    %14 = vector.load %arg5[%c0_11, %c0_12, %c0_13] : memref<1x32x1xf32, #tpu.memory_space<vmem>>, vector<1x32x1xf32>
    %15 = vector.shape_cast %14 : vector<1x32x1xf32> to vector<32x1xf32>
    %16 = arith.mulf %5, %5 : vector<32x256xf32>
    %cst_14 = arith.constant dense<0.000000e+00> : vector<32xf32>
    %17 = vector.multi_reduction <add>, %16, %cst_14 [1] : vector<32x256xf32> to vector<32xf32>
    %18 = vector.shape_cast %17 : vector<32xf32> to vector<32x1xf32>
    %19 = arith.addf %15, %18 : vector<32x1xf32>
    %c0_15 = arith.constant 0 : index
    %c0_16 = arith.constant 0 : index
    %c0_17 = arith.constant 0 : index
    %20 = vector.load %arg5[%c0_15, %c0_16, %c0_17] : memref<1x32x1xf32, #tpu.memory_space<vmem>>, vector<1x32x1xf32>
    %21 = vector.shape_cast %20 : vector<1x32x1xf32> to vector<32x1xf32>
    %22 = vector.shape_cast %19 : vector<32x1xf32> to vector<1x32x1xf32>
    tpu.vector_store %arg5[%c0_15, %c0_16, %c0_17], %22 {strides = array<i32>} : memref<1x32x1xf32, #tpu.memory_space<vmem>>, vector<1x32x1xf32>,
    return
  }
  func.func @transform_0(%arg0: i32, %arg1: i32) -> (i32, i32) {
    %c1_i32 = arith.constant 1 : i32
    %0 = arith.muli %arg0, %c1_i32 : i32
    %1 = arith.addi %0, %arg1 : i32
    %c0_i32 = arith.constant 0 : i32
    %c0_i32_0 = arith.constant 0 : i32
    return %c0_i32, %1 : i32, i32
  }
  func.func @transform_1(%arg0: i32, %arg1: i32) -> (i32, i32) {
    %c0_i32 = arith.constant 0 : i32
    %c0_i32_0 = arith.constant 0 : i32
    %c0_i32_1 = arith.constant 0 : i32
    return %c0_i32, %c0_i32_0 : i32, i32
  }
  func.func @transform_2(%arg0: i32, %arg1: i32) -> (i32, i32, i32) {
    %c0_i32 = arith.constant 0 : i32
    %c0_i32_0 = arith.constant 0 : i32
    %c0_i32_1 = arith.constant 0 : i32
    return %arg0, %c0_i32, %c0_i32_0 : i32, i32, i32
  }
  func.func @transform_3(%arg0: i32, %arg1: i32) -> (i32, i32, i32) {
    %c0_i32 = arith.constant 0 : i32
    %c0_i32_0 = arith.constant 0 : i32
    %c0_i32_1 = arith.constant 0 : i32
    return %arg0, %c0_i32, %c0_i32_0 : i32, i32, i32
  }
}

module attributes {stable_mosaic.version = 11 : i64} {
  func.func @deconv_bn_relu_kernel(%arg0: i32, %arg1: memref<4x256xf32, #tpu.memory_space<vmem>>, %arg2: memref<32x4xf32, #tpu.memory_space<vmem>>, %arg3: memref<32x1xf32, #tpu.memory_space<vmem>>, %arg4: memref<32x1xf32, #tpu.memory_space<vmem>>, %arg5: memref<32x256xf32, #tpu.memory_space<vmem>>) attributes {dimension_semantics = [#tpu.dimension_semantics<parallel>], iteration_bounds = array<i64: 2>, scalar_prefetch = 0 : i64, scratch_operands = 0 : i64, tpu.core_type = #tpu.core_type<tc>, window_params = [{transform_indices = @transform_0, window_bounds = array<i64: 4, 256>}, {pipeline_mode = #tpu.pipeline_mode<synchronous>, transform_indices = @transform_1, window_bounds = array<i64: 32, 4>}, {pipeline_mode = #tpu.pipeline_mode<synchronous>, transform_indices = @transform_2, window_bounds = array<i64: 32, 1>}, {pipeline_mode = #tpu.pipeline_mode<synchronous>, transform_indices = @transform_3, window_bounds = array<i64: 32, 1>}, {transform_indices = @transform_4, window_bounds = array<i64: 32, 256>}]} {
    %c0 = arith.constant 0 : index
    %c0_0 = arith.constant 0 : index
    %0 = vector.load %arg2[%c0, %c0_0] : memref<32x4xf32, #tpu.memory_space<vmem>>, vector<32x4xf32>
    %c0_1 = arith.constant 0 : index
    %c0_2 = arith.constant 0 : index
    %1 = vector.load %arg1[%c0_1, %c0_2] : memref<4x256xf32, #tpu.memory_space<vmem>>, vector<4x256xf32>
    %cst = arith.constant dense<0.000000e+00> : vector<32x256xf32>
    %2 = tpu.matmul %0, %1, %cst {dimension_numbers = #tpu.dot_dimension_numbers<[1], [0], [0], [1], [0, 0, 1, 1], [], []>} : vector<32x4xf32>, vector<4x256xf32>, vector<32x256xf32> -> vector<32x256xf32>
    %c0_3 = arith.constant 0 : index
    %c0_4 = arith.constant 0 : index
    %3 = vector.load %arg3[%c0_3, %c0_4] : memref<32x1xf32, #tpu.memory_space<vmem>>, vector<32x1xf32>
    %4 = vector.broadcast %3 : vector<32x1xf32> to vector<32x256xf32>
    %5 = arith.mulf %2, %4 : vector<32x256xf32>
    %c0_5 = arith.constant 0 : index
    %c0_6 = arith.constant 0 : index
    %6 = vector.load %arg4[%c0_5, %c0_6] : memref<32x1xf32, #tpu.memory_space<vmem>>, vector<32x1xf32>
    %7 = vector.broadcast %6 : vector<32x1xf32> to vector<32x256xf32>
    %8 = arith.addf %5, %7 : vector<32x256xf32>
    %cst_7 = arith.constant 0.000000e+00 : f32
    %9 = vector.broadcast %cst_7 : f32 to vector<32x256xf32>
    %10 = arith.maximumf %8, %9 : vector<32x256xf32>
    %c0_8 = arith.constant 0 : index
    %c0_9 = arith.constant 0 : index
    %11 = vector.load %arg5[%c0_8, %c0_9] : memref<32x256xf32, #tpu.memory_space<vmem>>, vector<32x256xf32>
    tpu.vector_store %arg5[%c0_8, %c0_9], %10 {strides = array<i32>} : memref<32x256xf32, #tpu.memory_space<vmem>>, vector<32x256xf32>,
    return
  }
  func.func @transform_0(%arg0: i32) -> (i32, i32) {
    %c0_i32 = arith.constant 0 : i32
    %c0_i32_0 = arith.constant 0 : i32
    return %c0_i32, %arg0 : i32, i32
  }
  func.func @transform_1(%arg0: i32) -> (i32, i32) {
    %c0_i32 = arith.constant 0 : i32
    %c0_i32_0 = arith.constant 0 : i32
    %c0_i32_1 = arith.constant 0 : i32
    return %c0_i32, %c0_i32_0 : i32, i32
  }
  func.func @transform_2(%arg0: i32) -> (i32, i32) {
    %c0_i32 = arith.constant 0 : i32
    %c0_i32_0 = arith.constant 0 : i32
    %c0_i32_1 = arith.constant 0 : i32
    return %c0_i32, %c0_i32_0 : i32, i32
  }
  func.func @transform_3(%arg0: i32) -> (i32, i32) {
    %c0_i32 = arith.constant 0 : i32
    %c0_i32_0 = arith.constant 0 : i32
    %c0_i32_1 = arith.constant 0 : i32
    return %c0_i32, %c0_i32_0 : i32, i32
  }
  func.func @transform_4(%arg0: i32) -> (i32, i32) {
    %c0_i32 = arith.constant 0 : i32
    %c0_i32_0 = arith.constant 0 : i32
    return %c0_i32, %arg0 : i32, i32
  }
}

</mosaic_0001>

<llo_original>
// kernel: tile.18
$region0: #{tile.18}
  #allocation0 [shape = 's32[1]{0}', space=sflag, size = 0x4, scoped, tag = 'scoped memory for tile.18']
  %s0 = inlined_call_operand.vmem [shape: f32[8], index: 0, kind: input, shape index: {}]
  %s1 = inlined_call_operand.vmem [shape: f32[4,8], index: 1, kind: output, shape index: {}]
  // Predicated region
  $region2: #{tile.18} parent=0 // pred_check
    _
  $region3: #{tile.18} parent=0 // pred_check_branch
    %3 = sbr.rel (0) target = $region5
  $region4: #{tile.18} parent=0 // pred_region
    _
  $region5: #{tile.18} parent=0 // pred_fallthru
    _
  %v4 = vld [vmem:[%s0] ss:$0 sm:$0xff]
  %5 = vst [vmem:[%s1] sm:$0xf] %v4

// kernel: tile.0
$region0: #{tile.0}
  %s0 = inlined_call_operand.vmem [shape: f32[4,8], index: 0, kind: input, shape index: {}]
  %s1 = inlined_call_operand.vmem [shape: f32[32,1], index: 1, kind: output, shape index: {}]
  $region1: #{tile.0} parent=0
    #allocation0 [shape = 'u8[4096]{0}', space=vmem, size = 0x1000, scoped, tag = 'scoped mem for input reshape']
    %s3 = ssub.s32 16, 1
    %v4 = vld [vmem:[%s0] sm:%s3]
    %5 = vst [vmem:[#allocation0] sm:%s3] %v4
    %v6 = vld [vmem:[#allocation0] sm:$0xf]
    %vm7 = vcmask 7168
    %8 = vst.msk [vmem:[%s1] ss:$8 sm:$0xf] %vm7, %v6
    %v9 = vld [vmem:[#allocation0] sm:$0xf]
    %10 = vrot.lane.b32.xlu0 %v9, 127
    %v11 = vpop.permute.xlu0 %10
    %vm12 = vcmask 7168
    %s13 = scalar_lea.vmem %s1, 1
    %14 = vst.msk [vmem:[%s13] ss:$8 sm:$0xf] %vm12, %v11
    %v15 = vld [vmem:[#allocation0] sm:$0xf]
    %16 = vrot.lane.b32.xlu0 %v15, 126
    %v17 = vpop.permute.xlu0 %16
    %vm18 = vcmask 7168
    %s19 = scalar_lea.vmem %s1, 2
    %20 = vst.msk [vmem:[%s19] ss:$8 sm:$0xf] %vm18, %v17
    %v21 = vld [vmem:[#allocation0] sm:$0xf]
    %22 = vrot.lane.b32.xlu0 %v21, 125
    %v23 = vpop.permute.xlu0 %22
    %vm24 = vcmask 7168
    %s25 = scalar_lea.vmem %s1, 3
    %26 = vst.msk [vmem:[%s25] ss:$8 sm:$0xf] %vm24, %v23
    %v27 = vld [vmem:[#allocation0] sm:$0xf]
    %28 = vrot.lane.b32.xlu0 %v27, 124
    %v29 = vpop.permute.xlu0 %28
    %vm30 = vcmask 7168
    %s31 = scalar_lea.vmem %s1, 4
    %32 = vst.msk [vmem:[%s31] ss:$8 sm:$0xf] %vm30, %v29
    %v33 = vld [vmem:[#allocation0] sm:$0xf]
    %34 = vrot.lane.b32.xlu0 %v33, 123
    %v35 = vpop.permute.xlu0 %34
    %vm36 = vcmask 7168
    %s37 = scalar_lea.vmem %s1, 5
    %38 = vst.msk [vmem:[%s37] ss:$8 sm:$0xf] %vm36, %v35
    %v39 = vld [vmem:[#allocation0] sm:$0xf]
    %40 = vrot.lane.b32.xlu0 %v39, 122
    %v41 = vpop.permute.xlu0 %40
    %vm42 = vcmask 7168
    %s43 = scalar_lea.vmem %s1, 6
    %44 = vst.msk [vmem:[%s43] ss:$8 sm:$0xf] %vm42, %v41
    %v45 = vld [vmem:[#allocation0] sm:$0xf]
    %46 = vrot.lane.b32.xlu0 %v45, 121
    %v47 = vpop.permute.xlu0 %46
    %vm48 = vcmask 7168
    %s49 = scalar_lea.vmem %s1, 7
    %50 = vst.msk [vmem:[%s49] ss:$8 sm:$0xf] %vm48, %v47

// kernel: deconv_block_forward.2
$region0: #{deconv_block_forward.2}
  #allocation0 [shape = 'u32[]', space=smem, size = 0x4, offset = 0x4, fixed_abs, tag = 'smem constant byte address 0x4 - core index']
  #allocation1 [shape = 'u32[72,128]{1,0:T(1,128)}', space=vmem, size = 0x9000, scoped, tag = 'internal scratch']
  %s0 = inlined_call_operand.vmem [shape: f32[4,512], index: 0, kind: input, shape index: {}]
  %s1 = inlined_call_operand.vmem [shape: f32[32,4], index: 1, kind: input, shape index: {}]
  %s2 = inlined_call_operand.vmem [shape: f32[2,32,1], index: 2, kind: output, shape index: {0}]
  %s3 = inlined_call_operand.vmem [shape: f32[2,32,1], index: 3, kind: output, shape index: {1}]
  %4 = xla_tuple %s2, %s3
  %s5 = sld [smem:[#allocation0]]
  $region53: #{deconv_block_forward.2} parent=0
    _
  %s7 = ssub.s32 1, %s5
  %s8 = scalar_select 0, %s7, %s5
  loop: start=0, step=1, limit=4
  $region2: #{deconv_block_forward.2} parent=0 // loop_pre_header
    _
  $region3: #{deconv_block_forward.2} parent=0 // loop_header
    %s10 = sphi 0, %s14
    %p11 = scmp.ge.s32.totalorder %s10, 4
    %s17 = sphi 0, %s29
    %s18 = sphi 0, %s25
    %s19 = sphi 0, %s17
    %s20 = sphi 0, %s18
    %s21 = sphi 0, %s19
    %s22 = sphi 0, %s20
    %s34 = sphi 0, %s36
    %s37 = sphi 0, %s34
    %s38 = sphi 0, %s37
    %s54 = sphi 0, %s38
    %s58 = sphi 0, %s58
    %s60 = sphi 0, %s58
    %s61 = sphi 0, %s60
    %s75 = sphi 0, %s61
    %s81 = sphi 0, %s83
    %s84 = sphi 0, %s81
    %s85 = sphi 0, %s84
    %s101 = sphi 0, %s85
    %s107 = sphi 0, %s109
    %s110 = sphi 0, %s107
    %s111 = sphi 0, %s110
    %s127 = sphi 0, %s111
  $region4: #{deconv_block_forward.2} parent=0 // loop_header_branch
    %13 = sbr.rel (%p11) target = $region8
  $region5: #{deconv_block_forward.2} parent=0 // loop_body
    %s15 = ssub.s32 %s10, 1
    %s16 = ssub.s32 %s10, 2
    %s23 = sadd.s32 1, %s18
    %p24 = scmp.ge.s32.totalorder %s23, 1
    %s25 = scalar_select %p24, 0, %s23
    %s26 = sadd.s32 1, %s17
    %s27 = scalar_select %p24, %s26, %s17
    %p28 = scmp.ge.s32.totalorder %s27, 2
    %s29 = scalar_select %p28, 0, %s27
    %s30 = sadd.s32 %s17, %s18
    %s31 = sadd.s32 %s29, %s25
    %s32 = ssub.s32 %s30, %s31
    %p33 = scmp.eq.s32.totalorder %s32, 0
    %s35 = sadd.s32 %s34, 1
    %s36 = scalar_select %p33, %s34, %s35
    %p39 = pneg %p33
    %p40 = scmp.eq.s32.totalorder %s10, 1
    %p41 = por %p39, %p40
    %p42 = scmp.ne.s32.totalorder %s34, %s37
    %p43 = scmp.eq.s32.totalorder %s10, 0
    %p44 = por %p42, %p43
    %p45 = scmp.ne.s32.totalorder %s34, %s37
    %p46 = scmp.eq.s32.totalorder %s15, 1
    %p47 = por %p45, %p46
    %p48 = scmp.ne.s32.totalorder %s37, %s38
    %p49 = scmp.eq.s32.totalorder %s15, 0
    %p50 = por %p48, %p49
    %p51 = scmp.ne.s32.totalorder %s37, %s38
    %p52 = scmp.eq.s32.totalorder %s16, 1
    %p53 = por %p51, %p52
    %p55 = scmp.ne.s32.totalorder %s38, %s54
    %p56 = scmp.eq.s32.totalorder %s16, 0
    %p57 = por %p55, %p56
    %s59 = sadd.s32 %s58, 1
    %p62 = scmp.eq.s32.totalorder %s10, 1
    %p63 = scmp.ne.s32.totalorder %s58, %s60
    %p64 = scmp.eq.s32.totalorder %s10, 0
    %p65 = por %p63, %p64
    %p66 = scmp.ne.s32.totalorder %s58, %s60
    %p67 = scmp.eq.s32.totalorder %s15, 1
    %p68 = por %p66, %p67
    %p69 = scmp.ne.s32.totalorder %s60, %s61
    %p70 = scmp.eq.s32.totalorder %s15, 0
    %p71 = por %p69, %p70
    %p72 = scmp.ne.s32.totalorder %s60, %s61
    %p73 = scmp.eq.s32.totalorder %s16, 1
    %p74 = por %p72, %p73
    %p76 = scmp.ne.s32.totalorder %s61, %s75
    %p77 = scmp.eq.s32.totalorder %s16, 0
    %p78 = por %p76, %p77
    %s79 = ssub.s32 %s17, %s29
    %p80 = scmp.eq.s32.totalorder %s79, 0
    %s82 = sadd.s32 %s81, 1
    %s83 = scalar_select %p80, %s81, %s82
    %p86 = pneg %p80
    %p87 = scmp.eq.s32.totalorder %s10, 1
    %p88 = por %p86, %p87
    %p89 = scmp.ne.s32.totalorder %s81, %s84
    %p90 = scmp.eq.s32.totalorder %s10, 0
    %p91 = por %p89, %p90
    %p92 = scmp.ne.s32.totalorder %s81, %s84
    %p93 = scmp.eq.s32.totalorder %s15, 1
    %p94 = por %p92, %p93
    %p95 = scmp.ne.s32.totalorder %s84, %s85
    %p96 = scmp.eq.s32.totalorder %s15, 0
    %p97 = por %p95, %p96
    %p98 = scmp.ne.s32.totalorder %s84, %s85
    %p99 = scmp.eq.s32.totalorder %s16, 1
    %p100 = por %p98, %p99
    %p102 = scmp.ne.s32.totalorder %s85, %s101
    %p103 = scmp.eq.s32.totalorder %s16, 0
    %p104 = por %p102, %p103
    %s105 = ssub.s32 %s17, %s29
    %p106 = scmp.eq.s32.totalorder %s105, 0
    %s108 = sadd.s32 %s107, 1
    %s109 = scalar_select %p106, %s107, %s108
    %p112 = pneg %p106
    %p113 = scmp.eq.s32.totalorder %s10, 1
    %p114 = por %p112, %p113
    %p115 = scmp.ne.s32.totalorder %s107, %s110
    %p116 = scmp.eq.s32.totalorder %s10, 0
    %p117 = por %p115, %p116
    %p118 = scmp.ne.s32.totalorder %s107, %s110
    %p119 = scmp.eq.s32.totalorder %s15, 1
    %p120 = por %p118, %p119
    %p121 = scmp.ne.s32.totalorder %s110, %s111
    %p122 = scmp.eq.s32.totalorder %s15, 0
    %p123 = por %p121, %p122
    %p124 = scmp.ne.s32.totalorder %s110, %s111
    %p125 = scmp.eq.s32.totalorder %s16, 1
    %p126 = por %p124, %p125
    %p128 = scmp.ne.s32.totalorder %s111, %s127
    %p129 = scmp.eq.s32.totalorder %s16, 0
    %p130 = por %p128, %p129
    %p131 = scmp.le.s32.totalorder 1, %s10
    %p132 = scmp.lt.s32.totalorder %s10, 3
    %p133 = pnand %p131, %p132
    %p134 = pneg %p133
    // Predicated region
    $region9: #{deconv_block_forward.2} parent=5 // pred_check
      _
    $region10: #{deconv_block_forward.2} parent=5 // pred_check_branch
      %136 = sbr.rel (%p133) target = $region12
    $region11: #{deconv_block_forward.2} parent=5 // pred_region
      %s137 = ssub.s32 %s10, 1
      // Predicated region
      $region13: #{deconv_block_forward.2} parent=11 // pred_check
        %p138 = pneg %p71
      $region14: #{deconv_block_forward.2} parent=11 // pred_check_branch
        %140 = sbr.rel (%p138) target = $region16
      $region15: #{deconv_block_forward.2} parent=11 // pred_region
        _
      $region16: #{deconv_block_forward.2} parent=11 // pred_fallthru
        _
    $region12: #{deconv_block_forward.2} parent=5 // pred_fallthru
      _
    %p141 = scmp.lt.s32.totalorder %s10, 2
    // Predicated region
    $region17: #{deconv_block_forward.2} parent=5 // pred_check
      %p142 = pneg %p141
    $region18: #{deconv_block_forward.2} parent=5 // pred_check_branch
      %144 = sbr.rel (%p142) target = $region20
    $region19: #{deconv_block_forward.2} parent=5 // pred_region
      // Predicated region
      $region21: #{deconv_block_forward.2} parent=19 // pred_check
        %p145 = pneg %p44
      $region22: #{deconv_block_forward.2} parent=19 // pred_check_branch
        %147 = sbr.rel (%p145) target = $region24
      $region23: #{deconv_block_forward.2} parent=19 // pred_region
        %s148 = sadd.s32 %s17, %s18
        %s149 = smul.u32 2, %s148
        %p150 = scmp.lt.s32.totalorder %s149, 3
        %s151 = scalar_select %p150, %s149, 3
        %s152 = smul.addr %s151, 4
        %s153 = scalar_lea.vmem %s0, %s152
        %s154 = sadd.s32 %s17, %s18
        %s155 = smul.u32 2, %s154
      $region24: #{deconv_block_forward.2} parent=19 // pred_fallthru
        _
    $region20: #{deconv_block_forward.2} parent=5 // pred_fallthru
      _
    %p156 = scmp.le.s32.totalorder 1, %s10
    %p157 = scmp.lt.s32.totalorder %s10, 3
    %p158 = pnand %p156, %p157
    %p159 = pneg %p158
    // Predicated region
    $region25: #{deconv_block_forward.2} parent=5 // pred_check
      _
    $region26: #{deconv_block_forward.2} parent=5 // pred_check_branch
      %161 = sbr.rel (%p158) target = $region28
    $region27: #{deconv_block_forward.2} parent=5 // pred_region
      %s162 = ssub.s32 %s10, 1
      %s163 = sadd.s32 %s19, %s20
      %s164 = smul.u32 2, %s163
      %p165 = scmp.lt.s32.totalorder %s164, 3
      %s166 = scalar_select %p165, %s164, 3
      %s167 = smul.addr %s166, 4
      %s168 = scalar_lea.vmem %s0, %s167
      %p169 = pneg %p50
      %p170 = pneg %p47
      %p171 = pneg %p71
      %p172 = pneg %p68
      %p173 = pneg %p97
      %p174 = pneg %p94
      %p175 = scmp.lt.s32.totalorder %s19, 1
      %s176 = scalar_select %p175, %s19, 1
      %s177 = smul.addr %s176, 4
      %s178 = smul.addr %s177, 8
      %s179 = scalar_lea.vmem %s2, %s178
      %p180 = pneg %p123
      %p181 = pneg %p120
      %p182 = scmp.lt.s32.totalorder %s19, 1
      %s183 = scalar_select %p182, %s19, 1
      %s184 = smul.addr %s183, 4
      %s185 = smul.addr %s184, 8
      %s186 = scalar_lea.vmem %s3, %s185
      %s187 = sadd.s32 %s19, %s20
      %s188 = smul.u32 2, %s187
      %p189 = scmp.lt.s32.totalorder %s188, 3
      %s190 = scalar_select %p189, %s188, 3
      %s191 = smul.addr %s190, 4
      %s192 = scalar_lea.vmem %s0, %s191
      %s193 = sadd.s32 %s19, %s20
      %s194 = smul.u32 2, %s193
      %p195 = scmp.lt.s32.totalorder %s19, 1
      %s196 = scalar_select %p195, %s19, 1
      %s197 = smul.addr %s196, 4
      %s198 = smul.addr %s197, 8
      %s199 = scalar_lea.vmem %s2, %s198
      %p200 = scmp.lt.s32.totalorder %s19, 1
      %s201 = scalar_select %p200, %s19, 1
      %s202 = smul.addr %s201, 4
      %s203 = smul.addr %s202, 8
      %s204 = scalar_lea.vmem %s3, %s203
      %p205 = scmp.eq.s32.totalorder %s20, 0
      // Predicated region
      $region29: #{deconv_block_forward.2} parent=27 // pred_check
        %p206 = pneg %p205
      $region30: #{deconv_block_forward.2} parent=27 // pred_check_branch
        %208 = sbr.rel (%p206) target = $region32
      $region31: #{deconv_block_forward.2} parent=27 // pred_region
        %vm209 = vcmask 7168
        %210 = vst.msk [vmem:[%s199] sm:$0xff] %vm209, 0.0
        %211 = vst.msk [vmem:[%s199 + $0x8] sm:$0xff] %vm209, 0.0
        %212 = vst.msk [vmem:[%s199 + $0x10] sm:$0xff] %vm209, 0.0
        %213 = vst.msk [vmem:[%s199 + $0x18] sm:$0xff] %vm209, 0.0
        %214 = vst.msk [vmem:[%s204] sm:$0xff] %vm209, 0.0
        %215 = vst.msk [vmem:[%s204 + $0x8] sm:$0xff] %vm209, 0.0
        %216 = vst.msk [vmem:[%s204 + $0x10] sm:$0xff] %vm209, 0.0
        %217 = vst.msk [vmem:[%s204 + $0x18] sm:$0xff] %vm209, 0.0
      $region32: #{deconv_block_forward.2} parent=27 // pred_fallthru
        _
      %v218 = vld [vmem:[%s1] sm:$0xff]
      %v219 = vld [vmem:[%s1 + $0x8] sm:$0xff]
      %v220 = vld [vmem:[%s1 + $0x10] sm:$0xff]
      %v221 = vld [vmem:[%s1 + $0x18] sm:$0xff]
      %v222 = vld [vmem:[%s192] sm:$0xff]
      %224 = vst [vmem:[#allocation1] ss:$2 sm:$0xff] %v222
      %v225 = vld.sshfl [vmem:[#allocation1] sm:$0xff pattern:$0x75316420]
      %v226 = vld.sshfl [vmem:[#allocation1 + $0x8] sm:$0xff pattern:$0x75316420]
      %vm227 = vcmask 31744
      %v229 = vsel %vm227, %v218, 0
      %v232 = vsel %vm227, %v219, 0
      %v235 = vsel %vm227, %v220, 0
      %v238 = vsel %vm227, %v221, 0
      %vm240 = vcmask 1043456
      %v241 = vsel %vm240, %v225, 0
      %v243 = vsel %vm240, %v226, 0
      %245 = vmatpush.msra.mxu0 0.0
      %246 = vmatpush.msra.mxu0 0.0
      %247 = vmatpush.msra.mxu0 0.0
      %248 = vmatpush.msra.mxu0 0.0
      %249 = vmatpush.msra.mxu0 0.0
      %250 = vmatpush.msra.mxu0 0.0
      %251 = vmatpush.msra.mxu0 0.0
      %252 = vmatpush.msra.mxu0 0.0
      %253 = vmatpush.msra.mxu0 0.0
      %254 = vmatpush.msra.mxu0 0.0
      %255 = vmatpush.msra.mxu0 0.0
      %256 = vmatpush.msra.mxu0 0.0
      %257 = vmatpush.msra.mxu0 0.0
      %258 = vmatpush.msra.mxu0 0.0
      %259 = vmatpush.msra.mxu0 0.0
      %260 = vmatpush.msra.mxu0 %v241
      %261 = vmatmul.f32.gmra.mxu0 %v229
      %v262 = vpop.f32.mrf.mxu0
      %v263 = vadd.f32 0.0, %v262
      %264 = vmatmul.f32.gmra.mxu0 %v232
      %v265 = vpop.f32.mrf.mxu0
      %v266 = vadd.f32 0.0, %v265
      %267 = vmatmul.f32.gmra.mxu0 %v235
      %v268 = vpop.f32.mrf.mxu0
      %v269 = vadd.f32 0.0, %v268
      %270 = vmatmul.f32.gmra.mxu0 %v238
      %v271 = vpop.f32.mrf.mxu0
      %v272 = vadd.f32 0.0, %v271
      %273 = vdwg.mxu0
      %274 = vmatpush.msra.mxu0 0.0
      %275 = vmatpush.msra.mxu0 0.0
      %276 = vmatpush.msra.mxu0 0.0
      %277 = vmatpush.msra.mxu0 0.0
      %278 = vmatpush.msra.mxu0 0.0
      %279 = vmatpush.msra.mxu0 0.0
      %280 = vmatpush.msra.mxu0 0.0
      %281 = vmatpush.msra.mxu0 0.0
      %282 = vmatpush.msra.mxu0 0.0
      %283 = vmatpush.msra.mxu0 0.0
      %284 = vmatpush.msra.mxu0 0.0
      %285 = vmatpush.msra.mxu0 0.0
      %286 = vmatpush.msra.mxu0 0.0
      %287 = vmatpush.msra.mxu0 0.0
      %288 = vmatpush.msra.mxu0 0.0
      %289 = vmatpush.msra.mxu0 %v243
      %290 = vmatmul.f32.gmra.mxu0 %v229
      %v291 = vpop.f32.mrf.mxu0
      %v292 = vadd.f32 0.0, %v291
      %293 = vmatmul.f32.gmra.mxu0 %v232
      %v294 = vpop.f32.mrf.mxu0
      %v295 = vadd.f32 0.0, %v294
      %296 = vmatmul.f32.gmra.mxu0 %v235
      %v297 = vpop.f32.mrf.mxu0
      %v298 = vadd.f32 0.0, %v297
      %299 = vmatmul.f32.gmra.mxu0 %v238
      %v300 = vpop.f32.mrf.mxu0
      %v301 = vadd.f32 0.0, %v300
      %302 = vdwg.mxu0
      %v303 = vld [vmem:[%s199] sm:$0xff]
      %v304 = vld [vmem:[%s199 + $0x8] sm:$0xff]
      %v305 = vld [vmem:[%s199 + $0x10] sm:$0xff]
      %v306 = vld [vmem:[%s199 + $0x18] sm:$0xff]
      %v307 = vadd.f32 %v263, %v292
      %308 = vadd.xlane.f32.xlu0 %v307
      %v309 = vpop.xlane.xlu0 %308
      %v310 = vadd.f32 %v266, %v295
      %311 = vadd.xlane.f32.xlu0 %v310
      %v312 = vpop.xlane.xlu0 %311
      %v313 = vadd.f32 %v269, %v298
      %314 = vadd.xlane.f32.xlu0 %v313
      %v315 = vpop.xlane.xlu0 %314
      %v316 = vadd.f32 %v272, %v301
      %317 = vadd.xlane.f32.xlu0 %v316
      %v318 = vpop.xlane.xlu0 %317
      %v319 = vadd.f32 %v303, %v309
      %v320 = vadd.f32 %v304, %v312
      %v321 = vadd.f32 %v305, %v315
      %v322 = vadd.f32 %v306, %v318
      %vm323 = vcmask 7168
      %324 = vst.msk [vmem:[%s199] sm:$0xff] %vm323, %v319
      %325 = vst.msk [vmem:[%s199 + $0x8] sm:$0xff] %vm323, %v320
      %326 = vst.msk [vmem:[%s199 + $0x10] sm:$0xff] %vm323, %v321
      %327 = vst.msk [vmem:[%s199 + $0x18] sm:$0xff] %vm323, %v322
      %v328 = vld [vmem:[%s204] sm:$0xff]
      %v329 = vld [vmem:[%s204 + $0x8] sm:$0xff]
      %v330 = vld [vmem:[%s204 + $0x10] sm:$0xff]
      %v331 = vld [vmem:[%s204 + $0x18] sm:$0xff]
      %v332 = vmul.f32 %v263, %v263
      %v333 = vmul.f32 %v292, %v292
      %v334 = vmul.f32 %v266, %v266
      %v335 = vmul.f32 %v295, %v295
      %v336 = vmul.f32 %v269, %v269
      %v337 = vmul.f32 %v298, %v298
      %v338 = vmul.f32 %v272, %v272
      %v339 = vmul.f32 %v301, %v301
      %v340 = vadd.f32 %v332, %v333
      %341 = vadd.xlane.f32.xlu0 %v340
      %v342 = vpop.xlane.xlu0 %341
      %v343 = vadd.f32 %v334, %v335
      %344 = vadd.xlane.f32.xlu0 %v343
      %v345 = vpop.xlane.xlu0 %344
      %v346 = vadd.f32 %v336, %v337
      %347 = vadd.xlane.f32.xlu0 %v346
      %v348 = vpop.xlane.xlu0 %347
      %v349 = vadd.f32 %v338, %v339
      %350 = vadd.xlane.f32.xlu0 %v349
      %v351 = vpop.xlane.xlu0 %350
      %v352 = vadd.f32 %v328, %v342
      %v353 = vadd.f32 %v329, %v345
      %v354 = vadd.f32 %v330, %v348
      %v355 = vadd.f32 %v331, %v351
      %356 = vst.msk [vmem:[%s204] sm:$0xff] %vm323, %v352
      %357 = vst.msk [vmem:[%s204 + $0x8] sm:$0xff] %vm323, %v353
      %358 = vst.msk [vmem:[%s204 + $0x10] sm:$0xff] %vm323, %v354
      %359 = vst.msk [vmem:[%s204 + $0x18] sm:$0xff] %vm323, %v355
      %p360 = scmp.lt.s32.totalorder %s19, 1
      %s361 = scalar_select %p360, %s19, 1
      %s362 = smul.addr %s361, 4
      %s363 = smul.addr %s362, 8
      %s364 = scalar_lea.vmem %s2, %s363
      %p365 = scmp.lt.s32.totalorder %s19, 1
      %s366 = scalar_select %p365, %s19, 1
      %s367 = smul.addr %s366, 4
      %s368 = smul.addr %s367, 8
      %s369 = scalar_lea.vmem %s3, %s368
      // Predicated region
      $region33: #{deconv_block_forward.2} parent=27 // pred_check
        %p370 = pneg %p94
      $region34: #{deconv_block_forward.2} parent=27 // pred_check_branch
        %372 = sbr.rel (%p370) target = $region36
      $region35: #{deconv_block_forward.2} parent=27 // pred_region
        _
      $region36: #{deconv_block_forward.2} parent=27 // pred_fallthru
        _
      // Predicated region
      $region37: #{deconv_block_forward.2} parent=27 // pred_check
        %p373 = pneg %p120
      $region38: #{deconv_block_forward.2} parent=27 // pred_check_branch
        %375 = sbr.rel (%p373) target = $region40
      $region39: #{deconv_block_forward.2} parent=27 // pred_region
        _
      $region40: #{deconv_block_forward.2} parent=27 // pred_fallthru
        _
    $region28: #{deconv_block_forward.2} parent=5 // pred_fallthru
      _
    %p376 = scmp.le.s32.totalorder 2, %s10
    // Predicated region
    $region41: #{deconv_block_forward.2} parent=5 // pred_check
      %p377 = pneg %p376
    $region42: #{deconv_block_forward.2} parent=5 // pred_check_branch
      %379 = sbr.rel (%p377) target = $region44
    $region43: #{deconv_block_forward.2} parent=5 // pred_region
      %s380 = ssub.s32 %s10, 2
      // Predicated region
      $region45: #{deconv_block_forward.2} parent=43 // pred_check
        %p381 = pneg %p100
      $region46: #{deconv_block_forward.2} parent=43 // pred_check_branch
        %383 = sbr.rel (%p381) target = $region48
      $region47: #{deconv_block_forward.2} parent=43 // pred_region
        %p384 = scmp.lt.s32.totalorder %s21, 1
        %s385 = scalar_select %p384, %s21, 1
        %s386 = smul.addr %s385, 4
        %s387 = smul.addr %s386, 8
        %s388 = scalar_lea.vmem %s2, %s387
      $region48: #{deconv_block_forward.2} parent=43 // pred_fallthru
        _
      // Predicated region
      $region49: #{deconv_block_forward.2} parent=43 // pred_check
        %p389 = pneg %p126
      $region50: #{deconv_block_forward.2} parent=43 // pred_check_branch
        %391 = sbr.rel (%p389) target = $region52
      $region51: #{deconv_block_forward.2} parent=43 // pred_region
        %p392 = scmp.lt.s32.totalorder %s21, 1
        %s393 = scalar_select %p392, %s21, 1
        %s394 = smul.addr %s393, 4
        %s395 = smul.addr %s394, 8
        %s396 = scalar_lea.vmem %s3, %s395
      $region52: #{deconv_block_forward.2} parent=43 // pred_fallthru
        _
    $region44: #{deconv_block_forward.2} parent=5 // pred_fallthru
      _
  $region6: #{deconv_block_forward.2} parent=0 // loop_footer
    %s14 = sadd.s32 1, %s10
  $region7: #{deconv_block_forward.2} parent=0 // loop_footer_branch
    %9 = sbr.rel target = $region3
  $region8: #{deconv_block_forward.2} parent=0 // loop_exit
    _

// kernel: deconv_block_forward.3
$region0: #{deconv_block_forward.3}
  #allocation0 [shape = 'u32[]', space=smem, size = 0x4, offset = 0x4, fixed_abs, tag = 'smem constant byte address 0x4 - core index']
  #allocation1 [shape = 'u32[72,128]{1,0:T(1,128)}', space=vmem, size = 0x9000, scoped, tag = 'internal scratch']
  %s0 = inlined_call_operand.vmem [shape: f32[4,512], index: 0, kind: input, shape index: {}]
  %s1 = inlined_call_operand.vmem [shape: f32[32,4], index: 1, kind: input, shape index: {}]
  %s2 = inlined_call_operand.vmem [shape: f32[32,1], index: 2, kind: input, shape index: {}]
  %s3 = inlined_call_operand.vmem [shape: f32[32,1], index: 3, kind: input, shape index: {}]
  %s4 = inlined_call_operand.vmem [shape: f32[32,512], index: 4, kind: output, shape index: {}]
  %s5 = sld [smem:[#allocation0]]
  $region68: #{deconv_block_forward.3} parent=0
    _
  %s7 = ssub.s32 1, %s5
  %s8 = scalar_select 0, %s7, %s5
  $region1: #{deconv_block_forward.3} parent=0
    #allocation2 [shape = 'u8[65536]{0}', space=vmem, size = 0x10000, scoped, tag = 'output window, operand 0']
    loop: start=0, step=1, limit=4
    $region2: #{deconv_block_forward.3} parent=1 // loop_pre_header
      _
    $region3: #{deconv_block_forward.3} parent=1 // loop_header
      %s10 = sphi 0, %s14
      %p11 = scmp.ge.s32.totalorder %s10, 4
      %s20 = sphi 0, %s22
      %s23 = sphi 0, %s20
      %s24 = sphi 0, %s23
      %s40 = sphi 0, %s24
      %s44 = sphi 0, %s44
      %s46 = sphi 0, %s44
      %s47 = sphi 0, %s46
      %s61 = sphi 0, %s47
      %s65 = sphi 0, %s65
      %s67 = sphi 0, %s65
      %s68 = sphi 0, %s67
      %s82 = sphi 0, %s68
      %s86 = sphi 0, %s86
      %s88 = sphi 0, %s86
      %s89 = sphi 0, %s88
      %s103 = sphi 0, %s89
      %s109 = sphi 0, %s111
      %s112 = sphi 0, %s109
      %s113 = sphi 0, %s112
      %s129 = sphi 0, %s113
    $region4: #{deconv_block_forward.3} parent=1 // loop_header_branch
      %13 = sbr.rel (%p11) target = $region8
    $region5: #{deconv_block_forward.3} parent=1 // loop_body
      %s15 = ssub.s32 %s10, 1
      %s16 = ssub.s32 %s10, 2
      %s17 = sadd.s32 %s10, 1
      %s18 = ssub.s32 %s10, %s17
      %p19 = scmp.eq.s32.totalorder %s18, 0
      %s21 = sadd.s32 %s20, 1
      %s22 = scalar_select %p19, %s20, %s21
      %p25 = pneg %p19
      %p26 = scmp.eq.s32.totalorder %s10, 1
      %p27 = por %p25, %p26
      %p28 = scmp.ne.s32.totalorder %s20, %s23
      %p29 = scmp.eq.s32.totalorder %s10, 0
      %p30 = por %p28, %p29
      %p31 = scmp.ne.s32.totalorder %s20, %s23
      %p32 = scmp.eq.s32.totalorder %s15, 1
      %p33 = por %p31, %p32
      %p34 = scmp.ne.s32.totalorder %s23, %s24
      %p35 = scmp.eq.s32.totalorder %s15, 0
      %p36 = por %p34, %p35
      %p37 = scmp.ne.s32.totalorder %s23, %s24
      %p38 = scmp.eq.s32.totalorder %s16, 1
      %p39 = por %p37, %p38
      %p41 = scmp.ne.s32.totalorder %s24, %s40
      %p42 = scmp.eq.s32.totalorder %s16, 0
      %p43 = por %p41, %p42
      %s45 = sadd.s32 %s44, 1
      %p48 = scmp.eq.s32.totalorder %s10, 1
      %p49 = scmp.ne.s32.totalorder %s44, %s46
      %p50 = scmp.eq.s32.totalorder %s10, 0
      %p51 = por %p49, %p50
      %p52 = scmp.ne.s32.totalorder %s44, %s46
      %p53 = scmp.eq.s32.totalorder %s15, 1
      %p54 = por %p52, %p53
      %p55 = scmp.ne.s32.totalorder %s46, %s47
      %p56 = scmp.eq.s32.totalorder %s15, 0
      %p57 = por %p55, %p56
      %p58 = scmp.ne.s32.totalorder %s46, %s47
      %p59 = scmp.eq.s32.totalorder %s16, 1
      %p60 = por %p58, %p59
      %p62 = scmp.ne.s32.totalorder %s47, %s61
      %p63 = scmp.eq.s32.totalorder %s16, 0
      %p64 = por %p62, %p63
      %s66 = sadd.s32 %s65, 1
      %p69 = scmp.eq.s32.totalorder %s10, 1
      %p70 = scmp.ne.s32.totalorder %s65, %s67
      %p71 = scmp.eq.s32.totalorder %s10, 0
      %p72 = por %p70, %p71
      %p73 = scmp.ne.s32.totalorder %s65, %s67
      %p74 = scmp.eq.s32.totalorder %s15, 1
      %p75 = por %p73, %p74
      %p76 = scmp.ne.s32.totalorder %s67, %s68
      %p77 = scmp.eq.s32.totalorder %s15, 0
      %p78 = por %p76, %p77
      %p79 = scmp.ne.s32.totalorder %s67, %s68
      %p80 = scmp.eq.s32.totalorder %s16, 1
      %p81 = por %p79, %p80
      %p83 = scmp.ne.s32.totalorder %s68, %s82
      %p84 = scmp.eq.s32.totalorder %s16, 0
      %p85 = por %p83, %p84
      %s87 = sadd.s32 %s86, 1
      %p90 = scmp.eq.s32.totalorder %s10, 1
      %p91 = scmp.ne.s32.totalorder %s86, %s88
      %p92 = scmp.eq.s32.totalorder %s10, 0
      %p93 = por %p91, %p92
      %p94 = scmp.ne.s32.totalorder %s86, %s88
      %p95 = scmp.eq.s32.totalorder %s15, 1
      %p96 = por %p94, %p95
      %p97 = scmp.ne.s32.totalorder %s88, %s89
      %p98 = scmp.eq.s32.totalorder %s15, 0
      %p99 = por %p97, %p98
      %p100 = scmp.ne.s32.totalorder %s88, %s89
      %p101 = scmp.eq.s32.totalorder %s16, 1
      %p102 = por %p100, %p101
      %p104 = scmp.ne.s32.totalorder %s89, %s103
      %p105 = scmp.eq.s32.totalorder %s16, 0
      %p106 = por %p104, %p105
      %s107 = ssub.s32 %s10, %s17
      %p108 = scmp.eq.s32.totalorder %s107, 0
      %s110 = sadd.s32 %s109, 1
      %s111 = scalar_select %p108, %s109, %s110
      %p114 = pneg %p108
      %p115 = scmp.eq.s32.totalorder %s10, 1
      %p116 = por %p114, %p115
      %p117 = scmp.ne.s32.totalorder %s109, %s112
      %p118 = scmp.eq.s32.totalorder %s10, 0
      %p119 = por %p117, %p118
      %p120 = scmp.ne.s32.totalorder %s109, %s112
      %p121 = scmp.eq.s32.totalorder %s15, 1
      %p122 = por %p120, %p121
      %p123 = scmp.ne.s32.totalorder %s112, %s113
      %p124 = scmp.eq.s32.totalorder %s15, 0
      %p125 = por %p123, %p124
      %p126 = scmp.ne.s32.totalorder %s112, %s113
      %p127 = scmp.eq.s32.totalorder %s16, 1
      %p128 = por %p126, %p127
      %p130 = scmp.ne.s32.totalorder %s113, %s129
      %p131 = scmp.eq.s32.totalorder %s16, 0
      %p132 = por %p130, %p131
      %p133 = scmp.le.s32.totalorder 1, %s10
      %p134 = scmp.lt.s32.totalorder %s10, 3
      %p135 = pnand %p133, %p134
      %p136 = pneg %p135
      // Predicated region
      $region9: #{deconv_block_forward.3} parent=5 // pred_check
        _
      $region10: #{deconv_block_forward.3} parent=5 // pred_check_branch
        %138 = sbr.rel (%p135) target = $region12
      $region11: #{deconv_block_forward.3} parent=5 // pred_region
        %s139 = ssub.s32 %s10, 1
        // Predicated region
        $region13: #{deconv_block_forward.3} parent=11 // pred_check
          %p140 = pneg %p57
        $region14: #{deconv_block_forward.3} parent=11 // pred_check_branch
          %142 = sbr.rel (%p140) target = $region16
        $region15: #{deconv_block_forward.3} parent=11 // pred_region
          _
        $region16: #{deconv_block_forward.3} parent=11 // pred_fallthru
          _
        // Predicated region
        $region17: #{deconv_block_forward.3} parent=11 // pred_check
          %p143 = pneg %p78
        $region18: #{deconv_block_forward.3} parent=11 // pred_check_branch
          %145 = sbr.rel (%p143) target = $region20
        $region19: #{deconv_block_forward.3} parent=11 // pred_region
          _
        $region20: #{deconv_block_forward.3} parent=11 // pred_fallthru
          _
        // Predicated region
        $region21: #{deconv_block_forward.3} parent=11 // pred_check
          %p146 = pneg %p99
        $region22: #{deconv_block_forward.3} parent=11 // pred_check_branch
          %148 = sbr.rel (%p146) target = $region24
        $region23: #{deconv_block_forward.3} parent=11 // pred_region
          _
        $region24: #{deconv_block_forward.3} parent=11 // pred_fallthru
          _
      $region12: #{deconv_block_forward.3} parent=5 // pred_fallthru
        _
      %p149 = scmp.lt.s32.totalorder %s10, 2
      // Predicated region
      $region25: #{deconv_block_forward.3} parent=5 // pred_check
        %p150 = pneg %p149
      $region26: #{deconv_block_forward.3} parent=5 // pred_check_branch
        %152 = sbr.rel (%p150) target = $region28
      $region27: #{deconv_block_forward.3} parent=5 // pred_region
        // Predicated region
        $region29: #{deconv_block_forward.3} parent=27 // pred_check
          %p153 = pneg %p30
        $region30: #{deconv_block_forward.3} parent=27 // pred_check_branch
          %155 = sbr.rel (%p153) target = $region32
        $region31: #{deconv_block_forward.3} parent=27 // pred_region
          %s156 = smul.u32 2, %s10
          %p157 = scmp.lt.s32.totalorder %s156, 3
          %s158 = scalar_select %p157, %s156, 3
          %s159 = smul.addr %s158, 4
          %s160 = scalar_lea.vmem %s0, %s159
          %s161 = smul.u32 2, %s10
        $region32: #{deconv_block_forward.3} parent=27 // pred_fallthru
          _
      $region28: #{deconv_block_forward.3} parent=5 // pred_fallthru
        _
      %p162 = scmp.le.s32.totalorder 1, %s10
      %p163 = scmp.lt.s32.totalorder %s10, 3
      %p164 = pnand %p162, %p163
      %p165 = pneg %p164
      // Predicated region
      $region33: #{deconv_block_forward.3} parent=5 // pred_check
        _
      $region34: #{deconv_block_forward.3} parent=5 // pred_check_branch
        %167 = sbr.rel (%p164) target = $region36
      $region35: #{deconv_block_forward.3} parent=5 // pred_region
        %s168 = ssub.s32 %s10, 1
        %s169 = smul.u32 2, %s15
        %p170 = scmp.lt.s32.totalorder %s169, 3
        %s171 = scalar_select %p170, %s169, 3
        %s172 = smul.addr %s171, 4
        %s173 = scalar_lea.vmem %s0, %s172
        %p174 = pneg %p36
        %p175 = pneg %p33
        %p176 = pneg %p57
        %p177 = pneg %p54
        %p178 = pneg %p78
        %p179 = pneg %p75
        %p180 = pneg %p99
        %p181 = pneg %p96
        %p182 = pneg %p125
        %p183 = pneg %p122
        %s184 = sand.u32 %s112, 1
        %s185 = sand.u32 %s112, 1
        %s186 = smul.addr %s185, 64
        %s187 = scalar_lea.vmem [#allocation2], %s186
        %s188 = smul.u32 2, %s15
        %p189 = scmp.lt.s32.totalorder %s188, 3
        %s190 = scalar_select %p189, %s188, 3
        %s191 = smul.addr %s190, 4
        %s192 = scalar_lea.vmem %s0, %s191
        %s193 = smul.u32 2, %s15
        %s194 = smul.u32 2, %s15
        %v195 = vld [vmem:[%s1] sm:$0xff]
        %v196 = vld [vmem:[%s1 + $0x8] sm:$0xff]
        %v197 = vld [vmem:[%s1 + $0x10] sm:$0xff]
        %v198 = vld [vmem:[%s1 + $0x18] sm:$0xff]
        %v199 = vld [vmem:[%s192] sm:$0xff]
        %201 = vst [vmem:[#allocation1] ss:$2 sm:$0xff] %v199
        %v202 = vld.sshfl [vmem:[#allocation1] sm:$0xff pattern:$0x75316420]
        %v203 = vld.sshfl [vmem:[#allocation1 + $0x8] sm:$0xff pattern:$0x75316420]
        %vm204 = vcmask 31744
        %v206 = vsel %vm204, %v195, 0
        %v209 = vsel %vm204, %v196, 0
        %v212 = vsel %vm204, %v197, 0
        %v215 = vsel %vm204, %v198, 0
        %vm217 = vcmask 1043456
        %v218 = vsel %vm217, %v202, 0
        %v220 = vsel %vm217, %v203, 0
        %222 = vmatpush.msra.mxu0 0.0
        %223 = vmatpush.msra.mxu0 0.0
        %224 = vmatpush.msra.mxu0 0.0
        %225 = vmatpush.msra.mxu0 0.0
        %226 = vmatpush.msra.mxu0 0.0
        %227 = vmatpush.msra.mxu0 0.0
        %228 = vmatpush.msra.mxu0 0.0
        %229 = vmatpush.msra.mxu0 0.0
        %230 = vmatpush.msra.mxu0 0.0
        %231 = vmatpush.msra.mxu0 0.0
        %232 = vmatpush.msra.mxu0 0.0
        %233 = vmatpush.msra.mxu0 0.0
        %234 = vmatpush.msra.mxu0 0.0
        %235 = vmatpush.msra.mxu0 0.0
        %236 = vmatpush.msra.mxu0 0.0
        %237 = vmatpush.msra.mxu0 %v218
        %238 = vmatmul.f32.gmra.mxu0 %v206
        %v239 = vpop.f32.mrf.mxu0
        %v240 = vadd.f32 0.0, %v239
        %241 = vmatmul.f32.gmra.mxu0 %v209
        %v242 = vpop.f32.mrf.mxu0
        %v243 = vadd.f32 0.0, %v242
        %244 = vmatmul.f32.gmra.mxu0 %v212
        %v245 = vpop.f32.mrf.mxu0
        %v246 = vadd.f32 0.0, %v245
        %247 = vmatmul.f32.gmra.mxu0 %v215
        %v248 = vpop.f32.mrf.mxu0
        %v249 = vadd.f32 0.0, %v248
        %250 = vdwg.mxu0
        %251 = vmatpush.msra.mxu0 0.0
        %252 = vmatpush.msra.mxu0 0.0
        %253 = vmatpush.msra.mxu0 0.0
        %254 = vmatpush.msra.mxu0 0.0
        %255 = vmatpush.msra.mxu0 0.0
        %256 = vmatpush.msra.mxu0 0.0
        %257 = vmatpush.msra.mxu0 0.0
        %258 = vmatpush.msra.mxu0 0.0
        %259 = vmatpush.msra.mxu0 0.0
        %260 = vmatpush.msra.mxu0 0.0
        %261 = vmatpush.msra.mxu0 0.0
        %262 = vmatpush.msra.mxu0 0.0
        %263 = vmatpush.msra.mxu0 0.0
        %264 = vmatpush.msra.mxu0 0.0
        %265 = vmatpush.msra.mxu0 0.0
        %266 = vmatpush.msra.mxu0 %v220
        %267 = vmatmul.f32.gmra.mxu0 %v206
        %v268 = vpop.f32.mrf.mxu0
        %v269 = vadd.f32 0.0, %v268
        %270 = vmatmul.f32.gmra.mxu0 %v209
        %v271 = vpop.f32.mrf.mxu0
        %v272 = vadd.f32 0.0, %v271
        %273 = vmatmul.f32.gmra.mxu0 %v212
        %v274 = vpop.f32.mrf.mxu0
        %v275 = vadd.f32 0.0, %v274
        %276 = vmatmul.f32.gmra.mxu0 %v215
        %v277 = vpop.f32.mrf.mxu0
        %v278 = vadd.f32 0.0, %v277
        %279 = vdwg.mxu0
        %v280 = vld [vmem:[%s2] sm:$0xff]
        %v281 = vld [vmem:[%s2 + $0x8] sm:$0xff]
        %v282 = vld [vmem:[%s2 + $0x10] sm:$0xff]
        %v283 = vld [vmem:[%s2 + $0x18] sm:$0xff]
        %285 = vset.pattern.permute.xlu0 0
        %286 = vperm.xlu0 %285, %v280
        %v287 = vpop.permute.xlu0 %286
        %290 = vset.pattern.permute.xlu0 0
        %291 = vperm.xlu0 %290, %v281
        %v292 = vpop.permute.xlu0 %291
        %295 = vset.pattern.permute.xlu0 0
        %296 = vperm.xlu0 %295, %v282
        %v297 = vpop.permute.xlu0 %296
        %300 = vset.pattern.permute.xlu0 0
        %301 = vperm.xlu0 %300, %v283
        %v302 = vpop.permute.xlu0 %301
        %v304 = vmul.f32 %v240, %v287
        %v305 = vmul.f32 %v269, %v287
        %v306 = vmul.f32 %v243, %v292
        %v307 = vmul.f32 %v272, %v292
        %v308 = vmul.f32 %v246, %v297
        %v309 = vmul.f32 %v275, %v297
        %v310 = vmul.f32 %v249, %v302
        %v311 = vmul.f32 %v278, %v302
        %v312 = vld [vmem:[%s3] sm:$0xff]
        %v313 = vld [vmem:[%s3 + $0x8] sm:$0xff]
        %v314 = vld [vmem:[%s3 + $0x10] sm:$0xff]
        %v315 = vld [vmem:[%s3 + $0x18] sm:$0xff]
        %317 = vset.pattern.permute.xlu0 0
        %318 = vperm.xlu0 %317, %v312
        %v319 = vpop.permute.xlu0 %318
        %322 = vset.pattern.permute.xlu0 0
        %323 = vperm.xlu0 %322, %v313
        %v324 = vpop.permute.xlu0 %323
        %327 = vset.pattern.permute.xlu0 0
        %328 = vperm.xlu0 %327, %v314
        %v329 = vpop.permute.xlu0 %328
        %332 = vset.pattern.permute.xlu0 0
        %333 = vperm.xlu0 %332, %v315
        %v334 = vpop.permute.xlu0 %333
        %v336 = vadd.f32 %v304, %v319
        %v337 = vadd.f32 %v305, %v319
        %v338 = vadd.f32 %v306, %v324
        %v339 = vadd.f32 %v307, %v324
        %v340 = vadd.f32 %v308, %v329
        %v341 = vadd.f32 %v309, %v329
        %v342 = vadd.f32 %v310, %v334
        %v343 = vadd.f32 %v311, %v334
        %v344 = vmax.f32 %v336, 0.0
        %v345 = vmax.f32 %v337, 0.0
        %v346 = vmax.f32 %v338, 0.0
        %v347 = vmax.f32 %v339, 0.0
        %v348 = vmax.f32 %v340, 0.0
        %v349 = vmax.f32 %v341, 0.0
        %v350 = vmax.f32 %v342, 0.0
        %v351 = vmax.f32 %v343, 0.0
        %352 = vst [vmem:[%s187] sm:$0xff] %v344
        %353 = vst [vmem:[%s187 + $0x8] sm:$0xff] %v345
        %354 = vst [vmem:[%s187 + $0x10] sm:$0xff] %v346
        %355 = vst [vmem:[%s187 + $0x18] sm:$0xff] %v347
        %356 = vst [vmem:[%s187 + $0x20] sm:$0xff] %v348
        %357 = vst [vmem:[%s187 + $0x28] sm:$0xff] %v349
        %358 = vst [vmem:[%s187 + $0x30] sm:$0xff] %v350
        %359 = vst [vmem:[%s187 + $0x38] sm:$0xff] %v351
        %s360 = sand.u32 %s112, 1
        %s361 = sand.u32 %s112, 1
        %s362 = smul.addr %s361, 64
        %s363 = scalar_lea.vmem [#allocation2], %s362
        // Predicated region
        $region37: #{deconv_block_forward.3} parent=35 // pred_check
          %p364 = pneg %p122
        $region38: #{deconv_block_forward.3} parent=35 // pred_check_branch
          %366 = sbr.rel (%p364) target = $region40
        $region39: #{deconv_block_forward.3} parent=35 // pred_region
          %s367 = smul.u32 2, %s15
          %s368 = smul.addr %s367, 8
          %s369 = scalar_lea.vmem %s4, %s368
          // Predicated region
          $region41: #{deconv_block_forward.3} parent=39 // pred_check
            _
          $region42: #{deconv_block_forward.3} parent=39 // pred_check_branch
            %371 = sbr.rel (0) target = $region44
          $region43: #{deconv_block_forward.3} parent=39 // pred_region
            // Predicated region
            $region45: #{deconv_block_forward.3} parent=43 // pred_check
              _
            $region46: #{deconv_block_forward.3} parent=43 // pred_check_branch
              %373 = sbr.rel (0) target = $region48
            $region47: #{deconv_block_forward.3} parent=43 // pred_region
              loop: start=0, step=1, limit=1
              $region49: #{deconv_block_forward.3} parent=47 // loop_pre_header
                _
              $region50: #{deconv_block_forward.3} parent=47 // loop_header
                %s375 = sphi 0, %s379
                %p376 = scmp.ge.s32.totalorder %s375, 1
                %s380 = sphi %s363, %s363
                %s381 = sphi %s369, %s369
              $region51: #{deconv_block_forward.3} parent=47 // loop_header_branch
                %378 = sbr.rel (%p376) target = $region55
              $region52: #{deconv_block_forward.3} parent=47 // loop_body
                %v382 = vld [vmem:[%s380] sm:$0xff]
                %383 = vst [vmem:[%s381] sm:$0xff] %v382
                %v384 = vld [vmem:[%s380 + $0x8] sm:$0xff]
                %385 = vst [vmem:[%s381 + $0x8] sm:$0xff] %v384
                %v386 = vld [vmem:[%s380 + $0x10] sm:$0xff]
                %387 = vst [vmem:[%s381 + $0x20] sm:$0xff] %v386
                %v388 = vld [vmem:[%s380 + $0x18] sm:$0xff]
                %389 = vst [vmem:[%s381 + $0x28] sm:$0xff] %v388
                %v390 = vld [vmem:[%s380 + $0x20] sm:$0xff]
                %391 = vst [vmem:[%s381 + $0x40] sm:$0xff] %v390
                %v392 = vld [vmem:[%s380 + $0x28] sm:$0xff]
                %393 = vst [vmem:[%s381 + $0x48] sm:$0xff] %v392
                %v394 = vld [vmem:[%s380 + $0x30] sm:$0xff]
                %395 = vst [vmem:[%s381 + $0x60] sm:$0xff] %v394
                %v396 = vld [vmem:[%s380 + $0x38] sm:$0xff]
                %397 = vst [vmem:[%s381 + $0x68] sm:$0xff] %v396
              $region53: #{deconv_block_forward.3} parent=47 // loop_footer
                %s379 = sadd.s32 1, %s375
              $region54: #{deconv_block_forward.3} parent=47 // loop_footer_branch
                %374 = sbr.rel target = $region50
              $region55: #{deconv_block_forward.3} parent=47 // loop_exit
                _
            $region48: #{deconv_block_forward.3} parent=43 // pred_fallthru
              _
            // Predicated region
            $region56: #{deconv_block_forward.3} parent=43 // pred_check
              _
            $region57: #{deconv_block_forward.3} parent=43 // pred_check_branch
              %399 = sbr.rel target = $region59
            $region58: #{deconv_block_forward.3} parent=43 // pred_region
              _
            $region59: #{deconv_block_forward.3} parent=43 // pred_fallthru
              _
          $region44: #{deconv_block_forward.3} parent=39 // pred_fallthru
            _
          %400 = vnop
        $region40: #{deconv_block_forward.3} parent=35 // pred_fallthru
          _
      $region36: #{deconv_block_forward.3} parent=5 // pred_fallthru
        _
      %p401 = scmp.le.s32.totalorder 2, %s10
      // Predicated region
      $region60: #{deconv_block_forward.3} parent=5 // pred_check
        %p402 = pneg %p401
      $region61: #{deconv_block_forward.3} parent=5 // pred_check_branch
        %404 = sbr.rel (%p402) target = $region63
      $region62: #{deconv_block_forward.3} parent=5 // pred_region
        %s405 = ssub.s32 %s10, 2
        // Predicated region
        $region64: #{deconv_block_forward.3} parent=62 // pred_check
          %p406 = pneg %p128
        $region65: #{deconv_block_forward.3} parent=62 // pred_check_branch
          %408 = sbr.rel (%p406) target = $region67
        $region66: #{deconv_block_forward.3} parent=62 // pred_region
          %s409 = sand.u32 %s113, 1
          %s410 = sand.u32 %s113, 1
          %s411 = smul.addr %s410, 64
          %s412 = scalar_lea.vmem [#allocation2], %s411
        $region67: #{deconv_block_forward.3} parent=62 // pred_fallthru
          _
      $region63: #{deconv_block_forward.3} parent=5 // pred_fallthru
        _
    $region6: #{deconv_block_forward.3} parent=1 // loop_footer
      %s14 = sadd.s32 1, %s10
    $region7: #{deconv_block_forward.3} parent=1 // loop_footer_branch
      %9 = sbr.rel target = $region3
    $region8: #{deconv_block_forward.3} parent=1 // loop_exit
      _

</llo_original>
